<compile_context>
chip_gen: v5e
topology: v5e:2x2
jax: 0.10.0
libtpu: 0.0.40
codegen_flags: <defaults>
</compile_context>

<pallas_src>
import functools

import jax
import jax.numpy as jnp
from jax.experimental import pallas as pl
from jax.experimental.pallas import tpu as pltpu


@functools.partial(
    jax.jit,
    static_argnames=("eps", "compute_dtype", "out_dtype", "block_n"))
def conv_bn_relu(x_nchw, weight, bias, gamma, beta, eps=1e-5,
                 compute_dtype=jnp.bfloat16, out_dtype=jnp.float32,
                 block_n=None):
    # bias is exactly cancelled by training-mode BN mean subtraction.
    del bias
    N, Cin, H, W = x_nchw.shape
    Cout = weight.shape[0]
    S = H * W                       # lane axis of all activation tiles (256 here)
    HpW = (H + 2) * W               # flattened H-padded row length per kw shift
    K = 3 * Cin                     # contraction after folding kw into channels

    # TODO(synk): if S is not a multiple of 128, pad S up and mask in the BN
    # pass so stores stay unmasked; the test shapes already have S = 256.

    cbytes = jnp.dtype(compute_dtype).itemsize
    obytes = jnp.dtype(out_dtype).itemsize

    # ---- batch-chunk size: amortize per-step overhead, keep blocks modest ----
    if block_n is None:
        per_sample = 3 * Cin * HpW * cbytes + Cout * S * (obytes + 4)
        block_n = int(max(1, min(N, (2 * 2**20) // max(per_sample, 1))))
    block_n = max(1, min(int(block_n), N))
    while N % block_n:              # require an even split of the batch
        block_n -= 1
    n_chunks = N // block_n

    # ---- small glue on the (small) input: pad + 3 kw-shifted flattened views,
    # with kw folded next to Cin so the reshape to (N, 3*Cin, HpW) is free. -----
    xp = jnp.pad(x_nchw.astype(compute_dtype),
                 ((0, 0), (0, 0), (1, 1), (1, 1)))            # (N,Cin,H+2,W+2)
    xs = jnp.stack([xp[:, :, :, kw:kw + W] for kw in range(3)], axis=1)
    xs = xs.reshape(N, K, HpW)                                # (N, 3*Cin, (H+2)*W)

    # Weights packed as (3, Cout, 3*Cin): w9[kh, o, kw*Cin + ci] = weight[o, ci, kh, kw]
    w9 = jnp.transpose(weight, (2, 0, 3, 1)).reshape(3, Cout, K).astype(compute_dtype)

    g2 = gamma.astype(jnp.float32).reshape(Cout, 1)
    b2 = beta.astype(jnp.float32).reshape(Cout, 1)

    inv_count = 1.0 / float(N * S)

    # ---- fused two-phase kernel -------------------------------------------------
    # grid = (phase, chunk); iteration order is chunk-fastest, so phase 0 (conv +
    # BN statistics) finishes for every chunk before phase 1 (BN apply + ReLU).
    def fused_kernel(x_ref, w_ref, gamma_ref, beta_ref, o_ref,
                     act_ref, ssum_ref, ssq_ref, scale_ref, shift_ref):
        p = pl.program_id(0)        # 0: conv + stats, 1: BN scale/shift + ReLU
        c = pl.program_id(1)        # batch-chunk index

        @pl.when(p == 0)
        def _conv_and_stats():
            @pl.when(c == 0)
            def _init():
                ssum_ref[...] = jnp.zeros_like(ssum_ref)
                ssq_ref[...] = jnp.zeros_like(ssq_ref)

            # Static unroll over the images of this chunk; each image is
            # 3 accumulating MXU matmuls (Cout, 3Cin) @ (3Cin, S).
            # acc is (Cout, S) f32 = Cout*S/1024 vregs -> fine at Cout=8.
            # TODO(synk): for large Cout add a Cout tile axis so the live
            # accumulator stays <= ~16-32 vregs.
            for b in range(block_n):
                acc = jnp.zeros((Cout, S), jnp.float32)
                for kh in range(3):
                    lo = kh * W                    # static lane-window start
                    xk = x_ref[b, :, lo:lo + S]    # (3*Cin, S) shifted window
                    acc = acc + jnp.dot(w_ref[kh], xk,
                                        preferred_element_type=jnp.float32)
                act_ref[c * block_n + b] = acc     # keep f32 activation in VMEM
                # Fused BN batch-statistic partials (lane reductions -> XLU).
                ssum_ref[...] += jnp.sum(acc, axis=1, keepdims=True)
                ssq_ref[...] += jnp.sum(acc * acc, axis=1, keepdims=True)

        @pl.when(p == 1)
        def _bn_relu():
            @pl.when(c == 0)
            def _finalize_stats():
                mean = ssum_ref[...] * inv_count
                var = jnp.maximum(ssq_ref[...] * inv_count - mean * mean, 0.0)
                scl = gamma_ref[...] * jax.lax.rsqrt(var + eps)   # EUP rsqrt
                scale_ref[...] = scl
                shift_ref[...] = beta_ref[...] - mean * scl

            for b in range(block_n):
                a = act_ref[c * block_n + b]                       # (Cout, S) f32
                y = a * scale_ref[...] + shift_ref[...]
                o_ref[b] = jnp.maximum(y, 0.0).astype(o_ref.dtype)

    # ---- VMEM budget (sized against v7x's 64 MiB physical VMEM) -----------------
    est_bytes = (N * Cout * S * 4                      # activation scratch (f32)
                 + 2 * block_n * K * HpW * cbytes      # double-buffered input blocks
                 + 2 * block_n * Cout * S * obytes     # double-buffered output blocks
                 + 3 * Cout * K * cbytes               # resident weights
                 + 6 * 8 * 128 * 4)                    # stats / scale / shift (padded)
    vmem_limit = int(min(48 * 2**20, max(32 * 2**20, 2 * est_bytes)))

    out = pl.pallas_call(
        fused_kernel,
        grid=(2, n_chunks),
        in_specs=[
            # phase 1 does not need the input: pin it to block 0 there so the
            # pipeline does not re-fetch it per chunk.
            pl.BlockSpec((block_n, K, HpW), lambda p, c: (c * (1 - p), 0, 0)),
            pl.BlockSpec((3, Cout, K), lambda p, c: (0, 0, 0)),     # resident weights
            pl.BlockSpec((Cout, 1), lambda p, c: (0, 0)),           # gamma
            pl.BlockSpec((Cout, 1), lambda p, c: (0, 0)),           # beta
        ],
        # phase 0 never writes the output: map all of phase 0 to block 0 so no
        # garbage is ever written back; phase 1 walks the blocks lane-densely.
        out_specs=pl.BlockSpec((block_n, Cout, S), lambda p, c: (c * p, 0, 0)),
        out_shape=jax.ShapeDtypeStruct((N, Cout, S), out_dtype),
        scratch_shapes=[
            pltpu.VMEM((N, Cout, S), jnp.float32),   # conv activations (no HBM trip)
            pltpu.VMEM((Cout, 1), jnp.float32),      # sum
            pltpu.VMEM((Cout, 1), jnp.float32),      # sum of squares
            pltpu.VMEM((Cout, 1), jnp.float32),      # BN scale
            pltpu.VMEM((Cout, 1), jnp.float32),      # BN shift
        ],
        compiler_params=pltpu.CompilerParams(
            # statistics / activations carry across both grid axes -> arbitrary.
            dimension_semantics=("arbitrary", "arbitrary"),
            vmem_limit_bytes=vmem_limit),
    )(xs, w9, g2, b2)

    # (N, Cout, H*W) slabs are already in NCHW order; this is just a reshape.
    return out.reshape(N, Cout, H, W)


def reference_conv_bn_relu(x, weight, bias, gamma, beta, eps=1e-5):
    """Pure-JAX reference mirroring the PyTorch module (training-mode BN)."""
    Cout = weight.shape[0]
    y = jax.lax.conv_general_dilated(
        x, weight, window_strides=(1, 1), padding=((1, 1), (1, 1)),
        dimension_numbers=("NCHW", "OIHW", "NCHW"))
    y = y + bias.reshape(1, Cout, 1, 1)
    mean = y.mean(axis=(0, 2, 3), keepdims=True)
    var = ((y - mean) ** 2).mean(axis=(0, 2, 3), keepdims=True)
    y = (y - mean) / jnp.sqrt(var + eps)
    y = y * gamma.reshape(1, Cout, 1, 1) + beta.reshape(1, Cout, 1, 1)
    return jnp.maximum(y, 0.0)


if __name__ == "__main__":
    key = jax.random.PRNGKey(0)
    k_x, k_w, k_b, k_g, k_be = jax.random.split(key, 5)

    N, Cin, H, W, Cout = 2, 4, 16, 16, 8

    x = jax.random.normal(k_x, (N, Cin, H, W), dtype=jnp.float32)
    weight = jax.random.normal(k_w, (Cout, Cin, 3, 3), dtype=jnp.float32) * 0.1
    bias = jax.random.normal(k_b, (Cout,), dtype=jnp.float32) * 0.1
    gamma = 1.0 + 0.1 * jax.random.normal(k_g, (Cout,), dtype=jnp.float32)
    beta = 0.1 * jax.random.normal(k_be, (Cout,), dtype=jnp.float32)

    ref = reference_conv_bn_relu(x, weight, bias, gamma, beta)

    # Exact-parity path: f32 MXU operands.
    out_f32 = jax.block_until_ready(
        conv_bn_relu(x, weight, bias, gamma, beta, compute_dtype=jnp.float32))
    assert out_f32.shape == (N, Cout, H, W)
    assert jnp.allclose(out_f32, ref, atol=2e-4, rtol=2e-4), (
        f"f32 path max abs err = {jnp.max(jnp.abs(out_f32 - ref))}")

    # Fast path: bf16 MXU operands, f32 accumulation + f32 BN statistics.
    out_bf16 = jax.block_until_ready(
        conv_bn_relu(x, weight, bias, gamma, beta, compute_dtype=jnp.bfloat16))
    assert out_bf16.shape == (N, Cout, H, W)
    assert jnp.allclose(out_bf16, ref, atol=6e-2, rtol=6e-2), (
        f"bf16 path max abs err = {jnp.max(jnp.abs(out_bf16 - ref))}")

    print("KERNEL_OK")
</pallas_src>

<mosaic_0001>
module attributes {stable_mosaic.version = 11 : i64} {
  func.func @fused_kernel(%arg0: i32, %arg1: i32, %arg2: memref<2x12x288xf32, #tpu.memory_space<vmem>>, %arg3: memref<3x8x12xf32, #tpu.memory_space<vmem>>, %arg4: memref<8x1xf32, #tpu.memory_space<vmem>>, %arg5: memref<8x1xf32, #tpu.memory_space<vmem>>, %arg6: memref<2x8x256xf32, #tpu.memory_space<vmem>>, %arg7: memref<2x8x256xf32, #tpu.memory_space<vmem>>, %arg8: memref<8x1xf32, #tpu.memory_space<vmem>>, %arg9: memref<8x1xf32, #tpu.memory_space<vmem>>, %arg10: memref<8x1xf32, #tpu.memory_space<vmem>>, %arg11: memref<8x1xf32, #tpu.memory_space<vmem>>) attributes {dimension_semantics = [#tpu.dimension_semantics<arbitrary>, #tpu.dimension_semantics<arbitrary>], iteration_bounds = array<i64: 2, 1>, scalar_prefetch = 0 : i64, scratch_operands = 5 : i64, tpu.core_type = #tpu.core_type<tc>, window_params = [{transform_indices = @transform_0, window_bounds = array<i64: 2, 12, 288>}, {pipeline_mode = #tpu.pipeline_mode<synchronous>, transform_indices = @transform_1, window_bounds = array<i64: 3, 8, 12>}, {pipeline_mode = #tpu.pipeline_mode<synchronous>, transform_indices = @transform_2, window_bounds = array<i64: 8, 1>}, {pipeline_mode = #tpu.pipeline_mode<synchronous>, transform_indices = @transform_3, window_bounds = array<i64: 8, 1>}, {transform_indices = @transform_4, window_bounds = array<i64: 2, 8, 256>}]} {
    %c0_i32 = arith.constant 0 : i32
    %0 = arith.cmpi eq, %arg0, %c0_i32 : i32
    %1 = arith.extui %0 : i1 to i32
    %c0_i32_0 = arith.constant 0 : i32
    %2 = arith.cmpi ne, %1, %c0_i32_0 : i32
    scf.if %2 {
      %c0_i32_2 = arith.constant 0 : i32
      %6 = arith.cmpi eq, %arg1, %c0_i32_2 : i32
      %7 = arith.extui %6 : i1 to i32
      %c0_i32_3 = arith.constant 0 : i32
      %8 = arith.cmpi ne, %7, %c0_i32_3 : i32
      scf.if %8 {
        %cst_69 = arith.constant 0.000000e+00 : f32
        %81 = vector.broadcast %cst_69 : f32 to vector<8x1xf32>
        %c0_70 = arith.constant 0 : index
        %c0_71 = arith.constant 0 : index
        %82 = vector.load %arg8[%c0_70, %c0_71] : memref<8x1xf32, #tpu.memory_space<vmem>>, vector<8x1xf32>
        tpu.vector_store %arg8[%c0_70, %c0_71], %81 {strides = array<i32>} : memref<8x1xf32, #tpu.memory_space<vmem>>, vector<8x1xf32>,
        %cst_72 = arith.constant 0.000000e+00 : f32
        %83 = vector.broadcast %cst_72 : f32 to vector<8x1xf32>
        %c0_73 = arith.constant 0 : index
        %c0_74 = arith.constant 0 : index
        %84 = vector.load %arg9[%c0_73, %c0_74] : memref<8x1xf32, #tpu.memory_space<vmem>>, vector<8x1xf32>
        tpu.vector_store %arg9[%c0_73, %c0_74], %83 {strides = array<i32>} : memref<8x1xf32, #tpu.memory_space<vmem>>, vector<8x1xf32>,
      } else {
      }
      %cst = arith.constant 0.000000e+00 : f32
      %9 = vector.broadcast %cst : f32 to vector<8x256xf32>
      %c0 = arith.constant 0 : index
      %c0_4 = arith.constant 0 : index
      %c0_5 = arith.constant 0 : index
      %10 = vector.load %arg2[%c0, %c0_4, %c0_5] : memref<2x12x288xf32, #tpu.memory_space<vmem>>, vector<1x12x256xf32>
      %11 = vector.shape_cast %10 : vector<1x12x256xf32> to vector<12x256xf32>
      %c0_6 = arith.constant 0 : index
      %c0_7 = arith.constant 0 : index
      %c0_8 = arith.constant 0 : index
      %12 = vector.load %arg3[%c0_6, %c0_7, %c0_8] : memref<3x8x12xf32, #tpu.memory_space<vmem>>, vector<1x8x12xf32>
      %13 = vector.shape_cast %12 : vector<1x8x12xf32> to vector<8x12xf32>
      %cst_9 = arith.constant dense<0.000000e+00> : vector<8x256xf32>
      %14 = tpu.matmul %13, %11, %cst_9 {dimension_numbers = #tpu.dot_dimension_numbers<[1], [0], [0], [1], [0, 0, 1, 1], [], []>} : vector<8x12xf32>, vector<12x256xf32>, vector<8x256xf32> -> vector<8x256xf32>
      %15 = arith.addf %9, %14 : vector<8x256xf32>
      %c0_10 = arith.constant 0 : index
      %c0_11 = arith.constant 0 : index
      %c16 = arith.constant 16 : index
      %16 = vector.load %arg2[%c0_10, %c0_11, %c16] : memref<2x12x288xf32, #tpu.memory_space<vmem>>, vector<1x12x256xf32>
      %17 = vector.shape_cast %16 : vector<1x12x256xf32> to vector<12x256xf32>
      %c1 = arith.constant 1 : index
      %c0_12 = arith.constant 0 : index
      %c0_13 = arith.constant 0 : index
      %18 = vector.load %arg3[%c1, %c0_12, %c0_13] : memref<3x8x12xf32, #tpu.memory_space<vmem>>, vector<1x8x12xf32>
      %19 = vector.shape_cast %18 : vector<1x8x12xf32> to vector<8x12xf32>
      %cst_14 = arith.constant dense<0.000000e+00> : vector<8x256xf32>
      %20 = tpu.matmul %19, %17, %cst_14 {dimension_numbers = #tpu.dot_dimension_numbers<[1], [0], [0], [1], [0, 0, 1, 1], [], []>} : vector<8x12xf32>, vector<12x256xf32>, vector<8x256xf32> -> vector<8x256xf32>
      %21 = arith.addf %15, %20 : vector<8x256xf32>
      %c0_15 = arith.constant 0 : index
      %c0_16 = arith.constant 0 : index
      %c32 = arith.constant 32 : index
      %22 = vector.load %arg2[%c0_15, %c0_16, %c32] : memref<2x12x288xf32, #tpu.memory_space<vmem>>, vector<1x12x256xf32>
      %23 = vector.shape_cast %22 : vector<1x12x256xf32> to vector<12x256xf32>
      %c2 = arith.constant 2 : index
      %c0_17 = arith.constant 0 : index
      %c0_18 = arith.constant 0 : index
      %24 = vector.load %arg3[%c2, %c0_17, %c0_18] : memref<3x8x12xf32, #tpu.memory_space<vmem>>, vector<1x8x12xf32>
      %25 = vector.shape_cast %24 : vector<1x8x12xf32> to vector<8x12xf32>
      %cst_19 = arith.constant dense<0.000000e+00> : vector<8x256xf32>
      %26 = tpu.matmul %25, %23, %cst_19 {dimension_numbers = #tpu.dot_dimension_numbers<[1], [0], [0], [1], [0, 0, 1, 1], [], []>} : vector<8x12xf32>, vector<12x256xf32>, vector<8x256xf32> -> vector<8x256xf32>
      %27 = arith.addf %21, %26 : vector<8x256xf32>
      %c2_i32 = arith.constant 2 : i32
      %28 = arith.muli %arg1, %c2_i32 : i32
      %c0_i32_20 = arith.constant 0 : i32
      %29 = arith.addi %28, %c0_i32_20 : i32
      %30 = arith.index_cast %29 : i32 to index
      %c0_21 = arith.constant 0 : index
      %c0_22 = arith.constant 0 : index
      %31 = vector.load %arg7[%30, %c0_21, %c0_22] : memref<2x8x256xf32, #tpu.memory_space<vmem>>, vector<1x8x256xf32>
      %32 = vector.shape_cast %31 : vector<1x8x256xf32> to vector<8x256xf32>
      %33 = vector.shape_cast %27 : vector<8x256xf32> to vector<1x8x256xf32>
      tpu.vector_store %arg7[%30, %c0_21, %c0_22], %33 {strides = array<i32>} : memref<2x8x256xf32, #tpu.memory_space<vmem>>, vector<1x8x256xf32>,
      %c0_23 = arith.constant 0 : index
      %c0_24 = arith.constant 0 : index
      %34 = vector.load %arg8[%c0_23, %c0_24] : memref<8x1xf32, #tpu.memory_space<vmem>>, vector<8x1xf32>
      %cst_25 = arith.constant dense<0.000000e+00> : vector<8xf32>
      %35 = vector.multi_reduction <add>, %27, %cst_25 [1] : vector<8x256xf32> to vector<8xf32>
      %36 = vector.shape_cast %35 : vector<8xf32> to vector<8x1xf32>
      %37 = arith.addf %34, %36 : vector<8x1xf32>
      %c0_26 = arith.constant 0 : index
      %c0_27 = arith.constant 0 : index
      %38 = vector.load %arg8[%c0_26, %c0_27] : memref<8x1xf32, #tpu.memory_space<vmem>>, vector<8x1xf32>
      tpu.vector_store %arg8[%c0_26, %c0_27], %37 {strides = array<i32>} : memref<8x1xf32, #tpu.memory_space<vmem>>, vector<8x1xf32>,
      %c0_28 = arith.constant 0 : index
      %c0_29 = arith.constant 0 : index
      %39 = vector.load %arg9[%c0_28, %c0_29] : memref<8x1xf32, #tpu.memory_space<vmem>>, vector<8x1xf32>
      %40 = arith.mulf %27, %27 : vector<8x256xf32>
      %cst_30 = arith.constant dense<0.000000e+00> : vector<8xf32>
      %41 = vector.multi_reduction <add>, %40, %cst_30 [1] : vector<8x256xf32> to vector<8xf32>
      %42 = vector.shape_cast %41 : vector<8xf32> to vector<8x1xf32>
      %43 = arith.addf %39, %42 : vector<8x1xf32>
      %c0_31 = arith.constant 0 : index
      %c0_32 = arith.constant 0 : index
      %44 = vector.load %arg9[%c0_31, %c0_32] : memref<8x1xf32, #tpu.memory_space<vmem>>, vector<8x1xf32>
      tpu.vector_store %arg9[%c0_31, %c0_32], %43 {strides = array<i32>} : memref<8x1xf32, #tpu.memory_space<vmem>>, vector<8x1xf32>,
      %cst_33 = arith.constant 0.000000e+00 : f32
      %45 = vector.broadcast %cst_33 : f32 to vector<8x256xf32>
      %c1_34 = arith.constant 1 : index
      %c0_35 = arith.constant 0 : index
      %c0_36 = arith.constant 0 : index
      %46 = vector.load %arg2[%c1_34, %c0_35, %c0_36] : memref<2x12x288xf32, #tpu.memory_space<vmem>>, vector<1x12x256xf32>
      %47 = vector.shape_cast %46 : vector<1x12x256xf32> to vector<12x256xf32>
      %c0_37 = arith.constant 0 : index
      %c0_38 = arith.constant 0 : index
      %c0_39 = arith.constant 0 : index
      %48 = vector.load %arg3[%c0_37, %c0_38, %c0_39] : memref<3x8x12xf32, #tpu.memory_space<vmem>>, vector<1x8x12xf32>
      %49 = vector.shape_cast %48 : vector<1x8x12xf32> to vector<8x12xf32>
      %cst_40 = arith.constant dense<0.000000e+00> : vector<8x256xf32>
      %50 = tpu.matmul %49, %47, %cst_40 {dimension_numbers = #tpu.dot_dimension_numbers<[1], [0], [0], [1], [0, 0, 1, 1], [], []>} : vector<8x12xf32>, vector<12x256xf32>, vector<8x256xf32> -> vector<8x256xf32>
      %51 = arith.addf %45, %50 : vector<8x256xf32>
      %c1_41 = arith.constant 1 : index
      %c0_42 = arith.constant 0 : index
      %c16_43 = arith.constant 16 : index
      %52 = vector.load %arg2[%c1_41, %c0_42, %c16_43] : memref<2x12x288xf32, #tpu.memory_space<vmem>>, vector<1x12x256xf32>
      %53 = vector.shape_cast %52 : vector<1x12x256xf32> to vector<12x256xf32>
      %c1_44 = arith.constant 1 : index
      %c0_45 = arith.constant 0 : index
      %c0_46 = arith.constant 0 : index
      %54 = vector.load %arg3[%c1_44, %c0_45, %c0_46] : memref<3x8x12xf32, #tpu.memory_space<vmem>>, vector<1x8x12xf32>
      %55 = vector.shape_cast %54 : vector<1x8x12xf32> to vector<8x12xf32>
      %cst_47 = arith.constant dense<0.000000e+00> : vector<8x256xf32>
      %56 = tpu.matmul %55, %53, %cst_47 {dimension_numbers = #tpu.dot_dimension_numbers<[1], [0], [0], [1], [0, 0, 1, 1], [], []>} : vector<8x12xf32>, vector<12x256xf32>, vector<8x256xf32> -> vector<8x256xf32>
      %57 = arith.addf %51, %56 : vector<8x256xf32>
      %c1_48 = arith.constant 1 : index
      %c0_49 = arith.constant 0 : index
      %c32_50 = arith.constant 32 : index
      %58 = vector.load %arg2[%c1_48, %c0_49, %c32_50] : memref<2x12x288xf32, #tpu.memory_space<vmem>>, vector<1x12x256xf32>
      %59 = vector.shape_cast %58 : vector<1x12x256xf32> to vector<12x256xf32>
      %c2_51 = arith.constant 2 : index
      %c0_52 = arith.constant 0 : index
      %c0_53 = arith.constant 0 : index
      %60 = vector.load %arg3[%c2_51, %c0_52, %c0_53] : memref<3x8x12xf32, #tpu.memory_space<vmem>>, vector<1x8x12xf32>
      %61 = vector.shape_cast %60 : vector<1x8x12xf32> to vector<8x12xf32>
      %cst_54 = arith.constant dense<0.000000e+00> : vector<8x256xf32>
      %62 = tpu.matmul %61, %59, %cst_54 {dimension_numbers = #tpu.dot_dimension_numbers<[1], [0], [0], [1], [0, 0, 1, 1], [], []>} : vector<8x12xf32>, vector<12x256xf32>, vector<8x256xf32> -> vector<8x256xf32>
      %63 = arith.addf %57, %62 : vector<8x256xf32>
      %c2_i32_55 = arith.constant 2 : i32
      %64 = arith.muli %arg1, %c2_i32_55 : i32
      %c1_i32_56 = arith.constant 1 : i32
      %65 = arith.addi %64, %c1_i32_56 : i32
      %66 = arith.index_cast %65 : i32 to index
      %c0_57 = arith.constant 0 : index
      %c0_58 = arith.constant 0 : index
      %67 = vector.load %arg7[%66, %c0_57, %c0_58] : memref<2x8x256xf32, #tpu.memory_space<vmem>>, vector<1x8x256xf32>
      %68 = vector.shape_cast %67 : vector<1x8x256xf32> to vector<8x256xf32>
      %69 = vector.shape_cast %63 : vector<8x256xf32> to vector<1x8x256xf32>
      tpu.vector_store %arg7[%66, %c0_57, %c0_58], %69 {strides = array<i32>} : memref<2x8x256xf32, #tpu.memory_space<vmem>>, vector<1x8x256xf32>,
      %c0_59 = arith.constant 0 : index
      %c0_60 = arith.constant 0 : index
      %70 = vector.load %arg8[%c0_59, %c0_60] : memref<8x1xf32, #tpu.memory_space<vmem>>, vector<8x1xf32>
      %cst_61 = arith.constant dense<0.000000e+00> : vector<8xf32>
      %71 = vector.multi_reduction <add>, %63, %cst_61 [1] : vector<8x256xf32> to vector<8xf32>
      %72 = vector.shape_cast %71 : vector<8xf32> to vector<8x1xf32>
      %73 = arith.addf %70, %72 : vector<8x1xf32>
      %c0_62 = arith.constant 0 : index
      %c0_63 = arith.constant 0 : index
      %74 = vector.load %arg8[%c0_62, %c0_63] : memref<8x1xf32, #tpu.memory_space<vmem>>, vector<8x1xf32>
      tpu.vector_store %arg8[%c0_62, %c0_63], %73 {strides = array<i32>} : memref<8x1xf32, #tpu.memory_space<vmem>>, vector<8x1xf32>,
      %c0_64 = arith.constant 0 : index
      %c0_65 = arith.constant 0 : index
      %75 = vector.load %arg9[%c0_64, %c0_65] : memref<8x1xf32, #tpu.memory_space<vmem>>, vector<8x1xf32>
      %76 = arith.mulf %63, %63 : vector<8x256xf32>
      %cst_66 = arith.constant dense<0.000000e+00> : vector<8xf32>
      %77 = vector.multi_reduction <add>, %76, %cst_66 [1] : vector<8x256xf32> to vector<8xf32>
      %78 = vector.shape_cast %77 : vector<8xf32> to vector<8x1xf32>
      %79 = arith.addf %75, %78 : vector<8x1xf32>
      %c0_67 = arith.constant 0 : index
      %c0_68 = arith.constant 0 : index
      %80 = vector.load %arg9[%c0_67, %c0_68] : memref<8x1xf32, #tpu.memory_space<vmem>>, vector<8x1xf32>
      tpu.vector_store %arg9[%c0_67, %c0_68], %79 {strides = array<i32>} : memref<8x1xf32, #tpu.memory_space<vmem>>, vector<8x1xf32>,
    } else {
    }
    %c1_i32 = arith.constant 1 : i32
    %3 = arith.cmpi eq, %arg0, %c1_i32 : i32
    %4 = arith.extui %3 : i1 to i32
    %c0_i32_1 = arith.constant 0 : i32
    %5 = arith.cmpi ne, %4, %c0_i32_1 : i32
    scf.if %5 {
      %c0_i32_2 = arith.constant 0 : i32
      %6 = arith.cmpi eq, %arg1, %c0_i32_2 : i32
      %7 = arith.extui %6 : i1 to i32
      %c0_i32_3 = arith.constant 0 : i32
      %8 = arith.cmpi ne, %7, %c0_i32_3 : i32
      scf.if %8 {
        %c0_24 = arith.constant 0 : index
        %c0_25 = arith.constant 0 : index
        %41 = vector.load %arg8[%c0_24, %c0_25] : memref<8x1xf32, #tpu.memory_space<vmem>>, vector<8x1xf32>
        %cst_26 = arith.constant 0.001953125 : f32
        %42 = vector.broadcast %cst_26 : f32 to vector<8x1xf32>
        %43 = arith.mulf %41, %42 : vector<8x1xf32>
        %c0_27 = arith.constant 0 : index
        %c0_28 = arith.constant 0 : index
        %44 = vector.load %arg9[%c0_27, %c0_28] : memref<8x1xf32, #tpu.memory_space<vmem>>, vector<8x1xf32>
        %cst_29 = arith.constant 0.001953125 : f32
        %45 = vector.broadcast %cst_29 : f32 to vector<8x1xf32>
        %46 = arith.mulf %44, %45 : vector<8x1xf32>
        %47 = arith.mulf %43, %43 : vector<8x1xf32>
        %48 = arith.subf %46, %47 : vector<8x1xf32>
        %cst_30 = arith.constant 0.000000e+00 : f32
        %49 = vector.broadcast %cst_30 : f32 to vector<8x1xf32>
        %50 = arith.maximumf %48, %49 : vector<8x1xf32>
        %c0_31 = arith.constant 0 : index
        %c0_32 = arith.constant 0 : index
        %51 = vector.load %arg4[%c0_31, %c0_32] : memref<8x1xf32, #tpu.memory_space<vmem>>, vector<8x1xf32>
        %cst_33 = arith.constant 9.99999974E-6 : f32
        %52 = vector.broadcast %cst_33 : f32 to vector<8x1xf32>
        %53 = arith.addf %50, %52 : vector<8x1xf32>
        %54 = math.rsqrt %53 : vector<8x1xf32>
        %55 = arith.mulf %51, %54 : vector<8x1xf32>
        %c0_34 = arith.constant 0 : index
        %c0_35 = arith.constant 0 : index
        %56 = vector.load %arg10[%c0_34, %c0_35] : memref<8x1xf32, #tpu.memory_space<vmem>>, vector<8x1xf32>
        tpu.vector_store %arg10[%c0_34, %c0_35], %55 {strides = array<i32>} : memref<8x1xf32, #tpu.memory_space<vmem>>, vector<8x1xf32>,
        %c0_36 = arith.constant 0 : index
        %c0_37 = arith.constant 0 : index
        %57 = vector.load %arg5[%c0_36, %c0_37] : memref<8x1xf32, #tpu.memory_space<vmem>>, vector<8x1xf32>
        %58 = arith.mulf %43, %55 : vector<8x1xf32>
        %59 = arith.subf %57, %58 : vector<8x1xf32>
        %c0_38 = arith.constant 0 : index
        %c0_39 = arith.constant 0 : index
        %60 = vector.load %arg11[%c0_38, %c0_39] : memref<8x1xf32, #tpu.memory_space<vmem>>, vector<8x1xf32>
        tpu.vector_store %arg11[%c0_38, %c0_39], %59 {strides = array<i32>} : memref<8x1xf32, #tpu.memory_space<vmem>>, vector<8x1xf32>,
      } else {
      }
      %c2_i32 = arith.constant 2 : i32
      %9 = arith.muli %arg1, %c2_i32 : i32
      %c0_i32_4 = arith.constant 0 : i32
      %10 = arith.addi %9, %c0_i32_4 : i32
      %11 = arith.index_cast %10 : i32 to index
      %c0 = arith.constant 0 : index
      %c0_5 = arith.constant 0 : index
      %12 = vector.load %arg7[%11, %c0, %c0_5] : memref<2x8x256xf32, #tpu.memory_space<vmem>>, vector<1x8x256xf32>
      %13 = vector.shape_cast %12 : vector<1x8x256xf32> to vector<8x256xf32>
      %c0_6 = arith.constant 0 : index
      %c0_7 = arith.constant 0 : index
      %14 = vector.load %arg10[%c0_6, %c0_7] : memref<8x1xf32, #tpu.memory_space<vmem>>, vector<8x1xf32>
      %15 = vector.broadcast %14 : vector<8x1xf32> to vector<8x256xf32>
      %16 = arith.mulf %13, %15 : vector<8x256xf32>
      %c0_8 = arith.constant 0 : index
      %c0_9 = arith.constant 0 : index
      %17 = vector.load %arg11[%c0_8, %c0_9] : memref<8x1xf32, #tpu.memory_space<vmem>>, vector<8x1xf32>
      %18 = vector.broadcast %17 : vector<8x1xf32> to vector<8x256xf32>
      %19 = arith.addf %16, %18 : vector<8x256xf32>
      %cst = arith.constant 0.000000e+00 : f32
      %20 = vector.broadcast %cst : f32 to vector<8x256xf32>
      %21 = arith.maximumf %19, %20 : vector<8x256xf32>
      %c0_10 = arith.constant 0 : index
      %c0_11 = arith.constant 0 : index
      %c0_12 = arith.constant 0 : index
      %22 = vector.load %arg6[%c0_10, %c0_11, %c0_12] : memref<2x8x256xf32, #tpu.memory_space<vmem>>, vector<1x8x256xf32>
      %23 = vector.shape_cast %22 : vector<1x8x256xf32> to vector<8x256xf32>
      %24 = vector.shape_cast %21 : vector<8x256xf32> to vector<1x8x256xf32>
      tpu.vector_store %arg6[%c0_10, %c0_11, %c0_12], %24 {strides = array<i32>} : memref<2x8x256xf32, #tpu.memory_space<vmem>>, vector<1x8x256xf32>,
      %c2_i32_13 = arith.constant 2 : i32
      %25 = arith.muli %arg1, %c2_i32_13 : i32
      %c1_i32_14 = arith.constant 1 : i32
      %26 = arith.addi %25, %c1_i32_14 : i32
      %27 = arith.index_cast %26 : i32 to index
      %c0_15 = arith.constant 0 : index
      %c0_16 = arith.constant 0 : index
      %28 = vector.load %arg7[%27, %c0_15, %c0_16] : memref<2x8x256xf32, #tpu.memory_space<vmem>>, vector<1x8x256xf32>
      %29 = vector.shape_cast %28 : vector<1x8x256xf32> to vector<8x256xf32>
      %c0_17 = arith.constant 0 : index
      %c0_18 = arith.constant 0 : index
      %30 = vector.load %arg10[%c0_17, %c0_18] : memref<8x1xf32, #tpu.memory_space<vmem>>, vector<8x1xf32>
      %31 = vector.broadcast %30 : vector<8x1xf32> to vector<8x256xf32>
      %32 = arith.mulf %29, %31 : vector<8x256xf32>
      %c0_19 = arith.constant 0 : index
      %c0_20 = arith.constant 0 : index
      %33 = vector.load %arg11[%c0_19, %c0_20] : memref<8x1xf32, #tpu.memory_space<vmem>>, vector<8x1xf32>
      %34 = vector.broadcast %33 : vector<8x1xf32> to vector<8x256xf32>
      %35 = arith.addf %32, %34 : vector<8x256xf32>
      %cst_21 = arith.constant 0.000000e+00 : f32
      %36 = vector.broadcast %cst_21 : f32 to vector<8x256xf32>
      %37 = arith.maximumf %35, %36 : vector<8x256xf32>
      %c1 = arith.constant 1 : index
      %c0_22 = arith.constant 0 : index
      %c0_23 = arith.constant 0 : index
      %38 = vector.load %arg6[%c1, %c0_22, %c0_23] : memref<2x8x256xf32, #tpu.memory_space<vmem>>, vector<1x8x256xf32>
      %39 = vector.shape_cast %38 : vector<1x8x256xf32> to vector<8x256xf32>
      %40 = vector.shape_cast %37 : vector<8x256xf32> to vector<1x8x256xf32>
      tpu.vector_store %arg6[%c1, %c0_22, %c0_23], %40 {strides = array<i32>} : memref<2x8x256xf32, #tpu.memory_space<vmem>>, vector<1x8x256xf32>,
    } else {
    }
    return
  }
  func.func @transform_0(%arg0: i32, %arg1: i32) -> (i32, i32, i32) {
    %c1_i32 = arith.constant 1 : i32
    %0 = arith.subi %c1_i32, %arg0 : i32
    %1 = arith.muli %arg1, %0 : i32
    %c0_i32 = arith.constant 0 : i32
    %c0_i32_0 = arith.constant 0 : i32
    %c0_i32_1 = arith.constant 0 : i32
    return %1, %c0_i32, %c0_i32_0 : i32, i32, i32
  }
  func.func @transform_1(%arg0: i32, %arg1: i32) -> (i32, i32, i32) {
    %c0_i32 = arith.constant 0 : i32
    %c0_i32_0 = arith.constant 0 : i32
    %c0_i32_1 = arith.constant 0 : i32
    %c0_i32_2 = arith.constant 0 : i32
    return %c0_i32, %c0_i32_0, %c0_i32_1 : i32, i32, i32
  }
  func.func @transform_2(%arg0: i32, %arg1: i32) -> (i32, i32) {
    %c0_i32 = arith.constant 0 : i32
    %c0_i32_0 = arith.constant 0 : i32
    %c0_i32_1 = arith.constant 0 : i32
    return %c0_i32, %c0_i32_0 : i32, i32
  }
  func.func @transform_3(%arg0: i32, %arg1: i32) -> (i32, i32) {
    %c0_i32 = arith.constant 0 : i32
    %c0_i32_0 = arith.constant 0 : i32
    %c0_i32_1 = arith.constant 0 : i32
    return %c0_i32, %c0_i32_0 : i32, i32
  }
  func.func @transform_4(%arg0: i32, %arg1: i32) -> (i32, i32, i32) {
    %0 = arith.muli %arg1, %arg0 : i32
    %c0_i32 = arith.constant 0 : i32
    %c0_i32_0 = arith.constant 0 : i32
    %c0_i32_1 = arith.constant 0 : i32
    return %0, %c0_i32, %c0_i32_0 : i32, i32, i32
  }
}

</mosaic_0001>

<llo_original>
// kernel: conv_bn_relu.1
$region0: #{conv_bn_relu.1}
  #allocation0 [shape = 'u32[]', space=smem, size = 0x4, offset = 0x4, fixed_abs, tag = 'smem constant byte address 0x4 - core index']
  #allocation1 [shape = 'u32[72,128]{1,0:T(1,128)}', space=vmem, size = 0x9000, scoped, tag = 'internal scratch']
  #allocation2 [shape = 'f32[2,8,256]{2,1,0:T(8,128)}', space=vmem, size = 0x4000, scoped, tag = 'scratch operand']
  #allocation3 [shape = 'f32[8,1]{1,0:T(8,128)}', space=vmem, size = 0x1000, scoped, tag = 'scratch operand']
  #allocation4 [shape = 'f32[8,1]{1,0:T(8,128)}', space=vmem, size = 0x1000, scoped, tag = 'scratch operand']
  #allocation5 [shape = 'f32[8,1]{1,0:T(8,128)}', space=vmem, size = 0x1000, scoped, tag = 'scratch operand']
  #allocation6 [shape = 'f32[8,1]{1,0:T(8,128)}', space=vmem, size = 0x1000, scoped, tag = 'scratch operand']
  %s0 = inlined_call_operand.vmem [shape: f32[2,12,288], index: 0, kind: input, shape index: {}]
  %s1 = inlined_call_operand.vmem [shape: f32[3,8,12], index: 1, kind: input, shape index: {}]
  %s2 = inlined_call_operand.vmem [shape: f32[8,1], index: 2, kind: input, shape index: {}]
  %s3 = inlined_call_operand.vmem [shape: f32[8,1], index: 3, kind: input, shape index: {}]
  %s4 = inlined_call_operand.vmem [shape: f32[2,8,256], index: 4, kind: output, shape index: {}]
  %s5 = sld [smem:[#allocation0]]
  $region65: #{conv_bn_relu.1} parent=0
    _
  %s7 = ssub.s32 1, %s5
  %s8 = scalar_select 0, %s7, %s5
  loop: start=0, step=1, limit=4
  $region2: #{conv_bn_relu.1} parent=0 // loop_pre_header
    _
  $region3: #{conv_bn_relu.1} parent=0 // loop_header
    %s10 = sphi 0, %s14
    %p11 = scmp.ge.s32.totalorder %s10, 4
    %s17 = sphi 0, %s29
    %s18 = sphi 0, %s25
    %s19 = sphi 0, %s17
    %s20 = sphi 0, %s18
    %s21 = sphi 0, %s19
    %s22 = sphi 0, %s20
    %s36 = sphi 0, %s38
    %s39 = sphi 0, %s36
    %s40 = sphi 0, %s39
    %s56 = sphi 0, %s40
    %s60 = sphi 0, %s60
    %s62 = sphi 0, %s60
    %s63 = sphi 0, %s62
    %s77 = sphi 0, %s63
    %s81 = sphi 0, %s81
    %s83 = sphi 0, %s81
    %s84 = sphi 0, %s83
    %s98 = sphi 0, %s84
    %s102 = sphi 0, %s102
    %s104 = sphi 0, %s102
    %s105 = sphi 0, %s104
    %s119 = sphi 0, %s105
    %s127 = sphi 0, %s129
    %s130 = sphi 0, %s127
    %s131 = sphi 0, %s130
    %s147 = sphi 0, %s131
  $region4: #{conv_bn_relu.1} parent=0 // loop_header_branch
    %13 = sbr.rel (%p11) target = $region8
  $region5: #{conv_bn_relu.1} parent=0 // loop_body
    %s15 = ssub.s32 %s10, 1
    %s16 = ssub.s32 %s10, 2
    %s23 = sadd.s32 1, %s18
    %p24 = scmp.ge.s32.totalorder %s23, 1
    %s25 = scalar_select %p24, 0, %s23
    %s26 = sadd.s32 1, %s17
    %s27 = scalar_select %p24, %s26, %s17
    %p28 = scmp.ge.s32.totalorder %s27, 2
    %s29 = scalar_select %p28, 0, %s27
    %s30 = ssub.s32 1, %s17
    %s31 = smul.u32 %s18, %s30
    %s32 = ssub.s32 1, %s29
    %s33 = smul.u32 %s25, %s32
    %s34 = ssub.s32 %s31, %s33
    %p35 = scmp.eq.s32.totalorder %s34, 0
    %s37 = sadd.s32 %s36, 1
    %s38 = scalar_select %p35, %s36, %s37
    %p41 = pneg %p35
    %p42 = scmp.eq.s32.totalorder %s10, 1
    %p43 = por %p41, %p42
    %p44 = scmp.ne.s32.totalorder %s36, %s39
    %p45 = scmp.eq.s32.totalorder %s10, 0
    %p46 = por %p44, %p45
    %p47 = scmp.ne.s32.totalorder %s36, %s39
    %p48 = scmp.eq.s32.totalorder %s15, 1
    %p49 = por %p47, %p48
    %p50 = scmp.ne.s32.totalorder %s39, %s40
    %p51 = scmp.eq.s32.totalorder %s15, 0
    %p52 = por %p50, %p51
    %p53 = scmp.ne.s32.totalorder %s39, %s40
    %p54 = scmp.eq.s32.totalorder %s16, 1
    %p55 = por %p53, %p54
    %p57 = scmp.ne.s32.totalorder %s40, %s56
    %p58 = scmp.eq.s32.totalorder %s16, 0
    %p59 = por %p57, %p58
    %s61 = sadd.s32 %s60, 1
    %p64 = scmp.eq.s32.totalorder %s10, 1
    %p65 = scmp.ne.s32.totalorder %s60, %s62
    %p66 = scmp.eq.s32.totalorder %s10, 0
    %p67 = por %p65, %p66
    %p68 = scmp.ne.s32.totalorder %s60, %s62
    %p69 = scmp.eq.s32.totalorder %s15, 1
    %p70 = por %p68, %p69
    %p71 = scmp.ne.s32.totalorder %s62, %s63
    %p72 = scmp.eq.s32.totalorder %s15, 0
    %p73 = por %p71, %p72
    %p74 = scmp.ne.s32.totalorder %s62, %s63
    %p75 = scmp.eq.s32.totalorder %s16, 1
    %p76 = por %p74, %p75
    %p78 = scmp.ne.s32.totalorder %s63, %s77
    %p79 = scmp.eq.s32.totalorder %s16, 0
    %p80 = por %p78, %p79
    %s82 = sadd.s32 %s81, 1
    %p85 = scmp.eq.s32.totalorder %s10, 1
    %p86 = scmp.ne.s32.totalorder %s81, %s83
    %p87 = scmp.eq.s32.totalorder %s10, 0
    %p88 = por %p86, %p87
    %p89 = scmp.ne.s32.totalorder %s81, %s83
    %p90 = scmp.eq.s32.totalorder %s15, 1
    %p91 = por %p89, %p90
    %p92 = scmp.ne.s32.totalorder %s83, %s84
    %p93 = scmp.eq.s32.totalorder %s15, 0
    %p94 = por %p92, %p93
    %p95 = scmp.ne.s32.totalorder %s83, %s84
    %p96 = scmp.eq.s32.totalorder %s16, 1
    %p97 = por %p95, %p96
    %p99 = scmp.ne.s32.totalorder %s84, %s98
    %p100 = scmp.eq.s32.totalorder %s16, 0
    %p101 = por %p99, %p100
    %s103 = sadd.s32 %s102, 1
    %p106 = scmp.eq.s32.totalorder %s10, 1
    %p107 = scmp.ne.s32.totalorder %s102, %s104
    %p108 = scmp.eq.s32.totalorder %s10, 0
    %p109 = por %p107, %p108
    %p110 = scmp.ne.s32.totalorder %s102, %s104
    %p111 = scmp.eq.s32.totalorder %s15, 1
    %p112 = por %p110, %p111
    %p113 = scmp.ne.s32.totalorder %s104, %s105
    %p114 = scmp.eq.s32.totalorder %s15, 0
    %p115 = por %p113, %p114
    %p116 = scmp.ne.s32.totalorder %s104, %s105
    %p117 = scmp.eq.s32.totalorder %s16, 1
    %p118 = por %p116, %p117
    %p120 = scmp.ne.s32.totalorder %s105, %s119
    %p121 = scmp.eq.s32.totalorder %s16, 0
    %p122 = por %p120, %p121
    %s123 = smul.u32 %s18, %s17
    %s124 = smul.u32 %s25, %s29
    %s125 = ssub.s32 %s123, %s124
    %p126 = scmp.eq.s32.totalorder %s125, 0
    %s128 = sadd.s32 %s127, 1
    %s129 = scalar_select %p126, %s127, %s128
    %p132 = pneg %p126
    %p133 = scmp.eq.s32.totalorder %s10, 1
    %p134 = por %p132, %p133
    %p135 = scmp.ne.s32.totalorder %s127, %s130
    %p136 = scmp.eq.s32.totalorder %s10, 0
    %p137 = por %p135, %p136
    %p138 = scmp.ne.s32.totalorder %s127, %s130
    %p139 = scmp.eq.s32.totalorder %s15, 1
    %p140 = por %p138, %p139
    %p141 = scmp.ne.s32.totalorder %s130, %s131
    %p142 = scmp.eq.s32.totalorder %s15, 0
    %p143 = por %p141, %p142
    %p144 = scmp.ne.s32.totalorder %s130, %s131
    %p145 = scmp.eq.s32.totalorder %s16, 1
    %p146 = por %p144, %p145
    %p148 = scmp.ne.s32.totalorder %s131, %s147
    %p149 = scmp.eq.s32.totalorder %s16, 0
    %p150 = por %p148, %p149
    %p151 = scmp.le.s32.totalorder 1, %s10
    %p152 = scmp.lt.s32.totalorder %s10, 3
    %p153 = pnand %p151, %p152
    %p154 = pneg %p153
    // Predicated region
    $region9: #{conv_bn_relu.1} parent=5 // pred_check
      _
    $region10: #{conv_bn_relu.1} parent=5 // pred_check_branch
      %156 = sbr.rel (%p153) target = $region12
    $region11: #{conv_bn_relu.1} parent=5 // pred_region
      %s157 = ssub.s32 %s10, 1
      // Predicated region
      $region13: #{conv_bn_relu.1} parent=11 // pred_check
        %p158 = pneg %p73
      $region14: #{conv_bn_relu.1} parent=11 // pred_check_branch
        %160 = sbr.rel (%p158) target = $region16
      $region15: #{conv_bn_relu.1} parent=11 // pred_region
        _
      $region16: #{conv_bn_relu.1} parent=11 // pred_fallthru
        _
      // Predicated region
      $region17: #{conv_bn_relu.1} parent=11 // pred_check
        %p161 = pneg %p94
      $region18: #{conv_bn_relu.1} parent=11 // pred_check_branch
        %163 = sbr.rel (%p161) target = $region20
      $region19: #{conv_bn_relu.1} parent=11 // pred_region
        _
      $region20: #{conv_bn_relu.1} parent=11 // pred_fallthru
        _
      // Predicated region
      $region21: #{conv_bn_relu.1} parent=11 // pred_check
        %p164 = pneg %p115
      $region22: #{conv_bn_relu.1} parent=11 // pred_check_branch
        %166 = sbr.rel (%p164) target = $region24
      $region23: #{conv_bn_relu.1} parent=11 // pred_region
        _
      $region24: #{conv_bn_relu.1} parent=11 // pred_fallthru
        _
    $region12: #{conv_bn_relu.1} parent=5 // pred_fallthru
      _
    %p167 = scmp.lt.s32.totalorder %s10, 2
    // Predicated region
    $region25: #{conv_bn_relu.1} parent=5 // pred_check
      %p168 = pneg %p167
    $region26: #{conv_bn_relu.1} parent=5 // pred_check_branch
      %170 = sbr.rel (%p168) target = $region28
    $region27: #{conv_bn_relu.1} parent=5 // pred_region
      // Predicated region
      $region29: #{conv_bn_relu.1} parent=27 // pred_check
        %p171 = pneg %p46
      $region30: #{conv_bn_relu.1} parent=27 // pred_check_branch
        %173 = sbr.rel (%p171) target = $region32
      $region31: #{conv_bn_relu.1} parent=27 // pred_region
        %s174 = ssub.s32 1, %s17
        %s175 = smul.u32 %s18, %s174
        %s176 = smul.u32 2, %s175
        %p177 = scmp.lt.s32.totalorder %s176, 1
        %s178 = scalar_select %p177, %s176, 1
        %s179 = smul.addr %s178, 6
        %s180 = smul.addr %s179, 8
        %s181 = scalar_lea.vmem %s0, %s180
        %s182 = ssub.s32 1, %s17
        %s183 = smul.u32 %s18, %s182
        %s184 = smul.u32 2, %s183
      $region32: #{conv_bn_relu.1} parent=27 // pred_fallthru
        _
    $region28: #{conv_bn_relu.1} parent=5 // pred_fallthru
      _
    %p185 = scmp.le.s32.totalorder 1, %s10
    %p186 = scmp.lt.s32.totalorder %s10, 3
    %p187 = pnand %p185, %p186
    %p188 = pneg %p187
    // Predicated region
    $region33: #{conv_bn_relu.1} parent=5 // pred_check
      _
    $region34: #{conv_bn_relu.1} parent=5 // pred_check_branch
      %190 = sbr.rel (%p187) target = $region36
    $region35: #{conv_bn_relu.1} parent=5 // pred_region
      %s191 = ssub.s32 %s10, 1
      %s192 = ssub.s32 1, %s19
      %s193 = smul.u32 %s20, %s192
      %s194 = smul.u32 2, %s193
      %p195 = scmp.lt.s32.totalorder %s194, 1
      %s196 = scalar_select %p195, %s194, 1
      %s197 = smul.addr %s196, 6
      %s198 = smul.addr %s197, 8
      %s199 = scalar_lea.vmem %s0, %s198
      %p200 = pneg %p52
      %p201 = pneg %p49
      %p202 = pneg %p73
      %p203 = pneg %p70
      %p204 = pneg %p94
      %p205 = pneg %p91
      %p206 = pneg %p115
      %p207 = pneg %p112
      %p208 = pneg %p143
      %p209 = pneg %p140
      %s210 = smul.u32 %s20, %s19
      %s211 = smul.u32 2, %s210
      %p212 = scmp.lt.s32.totalorder %s211, 1
      %s213 = scalar_select %p212, %s211, 1
      %s214 = smul.addr %s213, 2
      %s215 = smul.addr %s214, 8
      %s216 = scalar_lea.vmem %s4, %s215
      %s217 = ssub.s32 1, %s19
      %s218 = smul.u32 %s20, %s217
      %s219 = smul.u32 2, %s218
      %p220 = scmp.lt.s32.totalorder %s219, 1
      %s221 = scalar_select %p220, %s219, 1
      %s222 = smul.addr %s221, 6
      %s223 = smul.addr %s222, 8
      %s224 = scalar_lea.vmem %s0, %s223
      %s225 = ssub.s32 1, %s19
      %s226 = smul.u32 %s20, %s225
      %s227 = smul.u32 2, %s226
      %s228 = smul.u32 %s20, %s19
      %s229 = smul.u32 2, %s228
      %p230 = scmp.lt.s32.totalorder %s229, 1
      %s231 = scalar_select %p230, %s229, 1
      %s232 = smul.addr %s231, 2
      %s233 = smul.addr %s232, 8
      %s234 = scalar_lea.vmem %s4, %s233
      %s235 = smul.u32 %s20, %s19
      %s236 = smul.u32 2, %s235
      %p237 = scmp.eq.s32.totalorder %s19, 0
      // Predicated region
      $region37: #{conv_bn_relu.1} parent=35 // pred_check
        %p238 = pneg %p237
      $region38: #{conv_bn_relu.1} parent=35 // pred_check_branch
        %240 = sbr.rel (%p238) target = $region40
      $region39: #{conv_bn_relu.1} parent=35 // pred_region
        %p241 = scmp.eq.s32.totalorder %s20, 0
        // Predicated region
        $region41: #{conv_bn_relu.1} parent=39 // pred_check
          %p242 = pneg %p241
        $region42: #{conv_bn_relu.1} parent=39 // pred_check_branch
          %244 = sbr.rel (%p242) target = $region44
        $region43: #{conv_bn_relu.1} parent=39 // pred_region
          %vm245 = vcmask 7168
          %246 = vst.msk [vmem:[#allocation3] sm:$0xff] %vm245, 0.0
          %247 = vst.msk [vmem:[#allocation4] sm:$0xff] %vm245, 0.0
        $region44: #{conv_bn_relu.1} parent=39 // pred_fallthru
          _
        %v248 = vld [vmem:[%s224] sm:$0xff]
        %v249 = vld [vmem:[%s224 + $0x8] sm:$0xff]
        %v250 = vld [vmem:[%s224 + $0x18] sm:$0xf]
        %v251 = vld [vmem:[%s224 + $0x20] sm:$0xf]
        %v252 = vld [vmem:[%s1] sm:$0xff]
        %v253 = vld [vmem:[%s224 + $0x10] sm:$0xff]
        %v254 = vld [vmem:[%s224 + $0x28] sm:$0xf]
        %s255 = scalar_lea.vmem %s1, 8
        %v256 = vld [vmem:[%s255] sm:$0xff]
        %263 = vrot.lane.b32.xlu0 %v248, 112
        %v264 = vpop.permute.xlu0 %263
        %265 = vrot.lane.b32.xlu0 %v249, 112
        %v266 = vpop.permute.xlu0 %265
        %267 = vrot.lane.b32.xlu0 %v253, 112
        %v268 = vpop.permute.xlu0 %267
        %269 = vrot.lane.b32.xlu0 %v250, 112
        %v270 = vpop.permute.xlu0 %269
        %271 = vrot.lane.b32.xlu0 %v251, 112
        %v272 = vpop.permute.xlu0 %271
        %273 = vrot.lane.b32.xlu0 %v254, 112
        %v274 = vpop.permute.xlu0 %273
        %vm275 = vcmask 916480
        %v276 = vsel %vm275, %v264, %v266
        %v277 = vsel %vm275, %v266, %v268
        %v278 = vsel %vm275, %v270, %v272
        %v279 = vsel %vm275, %v272, %v274
        %vm282 = vcmask 97280
        %v284 = vsel %vm282, %v256, 0
        %vm286 = vcmask 1043456
        %v287 = vsel %vm286, %v278, 0
        %v289 = vsel %vm286, %v279, 0
        %291 = vmatpush.msra.mxu0 0.0
        %292 = vmatpush.msra.mxu0 0.0
        %293 = vmatpush.msra.mxu0 0.0
        %294 = vmatpush.msra.mxu0 0.0
        %295 = vmatpush.msra.mxu0 0.0
        %296 = vmatpush.msra.mxu0 0.0
        %297 = vmatpush.msra.mxu0 0.0
        %298 = vmatpush.msra.mxu0 0.0
        %299 = vmatpush.msra.mxu0 0.0
        %300 = vmatpush.msra.mxu0 0.0
        %301 = vmatpush.msra.mxu0 0.0
        %302 = vmatpush.msra.mxu0 0.0
        %303 = vmatpush.msra.mxu0 0.0
        %304 = vmatpush.msra.mxu0 0.0
        %305 = vmatpush.msra.mxu0 %v287
        %306 = vmatpush.msra.mxu0 %v276
        %307 = vmatmul.f32.gmra.mxu0 %v284
        %v308 = vpop.f32.mrf.mxu0
        %v309 = vadd.f32 0.0, %v308
        %310 = vdwg.mxu0
        %311 = vmatpush.msra.mxu0 0.0
        %312 = vmatpush.msra.mxu0 0.0
        %313 = vmatpush.msra.mxu0 0.0
        %314 = vmatpush.msra.mxu0 0.0
        %315 = vmatpush.msra.mxu0 0.0
        %316 = vmatpush.msra.mxu0 0.0
        %317 = vmatpush.msra.mxu0 0.0
        %318 = vmatpush.msra.mxu0 0.0
        %319 = vmatpush.msra.mxu0 0.0
        %320 = vmatpush.msra.mxu0 0.0
        %321 = vmatpush.msra.mxu0 0.0
        %322 = vmatpush.msra.mxu0 0.0
        %323 = vmatpush.msra.mxu0 0.0
        %324 = vmatpush.msra.mxu0 0.0
        %325 = vmatpush.msra.mxu0 %v289
        %326 = vmatpush.msra.mxu0 %v277
        %327 = vmatmul.f32.gmra.mxu0 %v284
        %v328 = vpop.f32.mrf.mxu0
        %v329 = vadd.f32 0.0, %v328
        %330 = vdwg.mxu0
        %v332 = vsel %vm282, %v252, 0
        %v334 = vsel %vm286, %v250, 0
        %v336 = vsel %vm286, %v251, 0
        %338 = vmatpush.msra.mxu0 0.0
        %339 = vmatpush.msra.mxu0 0.0
        %340 = vmatpush.msra.mxu0 0.0
        %341 = vmatpush.msra.mxu0 0.0
        %342 = vmatpush.msra.mxu0 0.0
        %343 = vmatpush.msra.mxu0 0.0
        %344 = vmatpush.msra.mxu0 0.0
        %345 = vmatpush.msra.mxu0 0.0
        %346 = vmatpush.msra.mxu0 0.0
        %347 = vmatpush.msra.mxu0 0.0
        %348 = vmatpush.msra.mxu0 0.0
        %349 = vmatpush.msra.mxu0 0.0
        %350 = vmatpush.msra.mxu0 0.0
        %351 = vmatpush.msra.mxu0 0.0
        %352 = vmatpush.msra.mxu0 %v334
        %353 = vmatpush.msra.mxu0 %v248
        %354 = vmatmul.f32.gmra.mxu0 %v332
        %v355 = vpop.f32.mrf.mxu0
        %v356 = vadd.f32 %v309, %v355
        %357 = vdwg.mxu0
        %358 = vmatpush.msra.mxu0 0.0
        %359 = vmatpush.msra.mxu0 0.0
        %360 = vmatpush.msra.mxu0 0.0
        %361 = vmatpush.msra.mxu0 0.0
        %362 = vmatpush.msra.mxu0 0.0
        %363 = vmatpush.msra.mxu0 0.0
        %364 = vmatpush.msra.mxu0 0.0
        %365 = vmatpush.msra.mxu0 0.0
        %366 = vmatpush.msra.mxu0 0.0
        %367 = vmatpush.msra.mxu0 0.0
        %368 = vmatpush.msra.mxu0 0.0
        %369 = vmatpush.msra.mxu0 0.0
        %370 = vmatpush.msra.mxu0 0.0
        %371 = vmatpush.msra.mxu0 0.0
        %372 = vmatpush.msra.mxu0 %v336
        %373 = vmatpush.msra.mxu0 %v249
        %374 = vmatmul.f32.gmra.mxu0 %v332
        %v375 = vpop.f32.mrf.mxu0
        %v376 = vadd.f32 %v329, %v375
        %377 = vdwg.mxu0
        %s378 = scalar_lea.vmem %s1, 16
        %v379 = vld [vmem:[%s378] sm:$0xff]
        %380 = vrot.lane.b32.xlu0 %v248, 96
        %v381 = vpop.permute.xlu0 %380
        %382 = vrot.lane.b32.xlu0 %v249, 96
        %v383 = vpop.permute.xlu0 %382
        %384 = vrot.lane.b32.xlu0 %v253, 96
        %v385 = vpop.permute.xlu0 %384
        %386 = vrot.lane.b32.xlu0 %v250, 96
        %v387 = vpop.permute.xlu0 %386
        %388 = vrot.lane.b32.xlu0 %v251, 96
        %v389 = vpop.permute.xlu0 %388
        %390 = vrot.lane.b32.xlu0 %v254, 96
        %v391 = vpop.permute.xlu0 %390
        %vm392 = vcmask 785408
        %v393 = vsel %vm392, %v381, %v383
        %v394 = vsel %vm392, %v383, %v385
        %v395 = vsel %vm392, %v387, %v389
        %v396 = vsel %vm392, %v389, %v391
        %v400 = vsel %vm282, %v379, 0
        %v402 = vsel %vm286, %v395, 0
        %v404 = vsel %vm286, %v396, 0
        %406 = vmatpush.msra.mxu0 0.0
        %407 = vmatpush.msra.mxu0 0.0
        %408 = vmatpush.msra.mxu0 0.0
        %409 = vmatpush.msra.mxu0 0.0
        %410 = vmatpush.msra.mxu0 0.0
        %411 = vmatpush.msra.mxu0 0.0
        %412 = vmatpush.msra.mxu0 0.0
        %413 = vmatpush.msra.mxu0 0.0
        %414 = vmatpush.msra.mxu0 0.0
        %415 = vmatpush.msra.mxu0 0.0
        %416 = vmatpush.msra.mxu0 0.0
        %417 = vmatpush.msra.mxu0 0.0
        %418 = vmatpush.msra.mxu0 0.0
        %419 = vmatpush.msra.mxu0 0.0
        %420 = vmatpush.msra.mxu0 %v402
        %421 = vmatpush.msra.mxu0 %v393
        %422 = vmatmul.f32.gmra.mxu0 %v400
        %v423 = vpop.f32.mrf.mxu0
        %v424 = vadd.f32 0.0, %v423
        %425 = vdwg.mxu0
        %426 = vmatpush.msra.mxu0 0.0
        %427 = vmatpush.msra.mxu0 0.0
        %428 = vmatpush.msra.mxu0 0.0
        %429 = vmatpush.msra.mxu0 0.0
        %430 = vmatpush.msra.mxu0 0.0
        %431 = vmatpush.msra.mxu0 0.0
        %432 = vmatpush.msra.mxu0 0.0
        %433 = vmatpush.msra.mxu0 0.0
        %434 = vmatpush.msra.mxu0 0.0
        %435 = vmatpush.msra.mxu0 0.0
        %436 = vmatpush.msra.mxu0 0.0
        %437 = vmatpush.msra.mxu0 0.0
        %438 = vmatpush.msra.mxu0 0.0
        %439 = vmatpush.msra.mxu0 0.0
        %440 = vmatpush.msra.mxu0 %v404
        %441 = vmatpush.msra.mxu0 %v394
        %442 = vmatmul.f32.gmra.mxu0 %v400
        %v443 = vpop.f32.mrf.mxu0
        %v444 = vadd.f32 0.0, %v443
        %445 = vdwg.mxu0
        %v446 = vadd.f32 %v356, %v424
        %v447 = vadd.f32 %v376, %v444
        %s448 = smul.u32 %s20, 2
        %s449 = smul.u32 %s448, 2
        %s450 = smul.addr %s449, 8
        %s451 = scalar_lea.vmem [#allocation2], %s450
        %452 = vst [vmem:[%s451] sm:$0xff] %v446
        %453 = vst [vmem:[%s451 + $0x8] sm:$0xff] %v447
        %v454 = vld [vmem:[#allocation3] sm:$0xff]
        %v455 = vadd.f32 %v446, %v447
        %456 = vadd.xlane.f32.xlu0 %v455
        %v457 = vpop.xlane.xlu0 %456
        %v458 = vadd.f32 %v454, %v457
        %vm459 = vcmask 7168
        %460 = vst.msk [vmem:[#allocation3] sm:$0xff] %vm459, %v458
        %v461 = vld [vmem:[#allocation4] sm:$0xff]
        %v462 = vmul.f32 %v446, %v446
        %v463 = vmul.f32 %v447, %v447
        %v464 = vadd.f32 %v462, %v463
        %465 = vadd.xlane.f32.xlu0 %v464
        %v466 = vpop.xlane.xlu0 %465
        %v467 = vadd.f32 %v461, %v466
        %468 = vst.msk [vmem:[#allocation4] sm:$0xff] %vm459, %v467
        %s469 = scalar_lea.vmem %s224, 48
        %v470 = vld [vmem:[%s469] sm:$0xff]
        %v471 = vld [vmem:[%s469 + $0x8] sm:$0xff]
        %v472 = vld [vmem:[%s469 + $0x18] sm:$0xf]
        %v473 = vld [vmem:[%s469 + $0x20] sm:$0xf]
        %v474 = vld [vmem:[%s1] sm:$0xff]
        %v475 = vld [vmem:[%s469 + $0x10] sm:$0xff]
        %v476 = vld [vmem:[%s469 + $0x28] sm:$0xf]
        %v477 = vld [vmem:[%s255] sm:$0xff]
        %484 = vrot.lane.b32.xlu0 %v470, 112
        %v485 = vpop.permute.xlu0 %484
        %486 = vrot.lane.b32.xlu0 %v471, 112
        %v487 = vpop.permute.xlu0 %486
        %488 = vrot.lane.b32.xlu0 %v475, 112
        %v489 = vpop.permute.xlu0 %488
        %490 = vrot.lane.b32.xlu0 %v472, 112
        %v491 = vpop.permute.xlu0 %490
        %492 = vrot.lane.b32.xlu0 %v473, 112
        %v493 = vpop.permute.xlu0 %492
        %494 = vrot.lane.b32.xlu0 %v476, 112
        %v495 = vpop.permute.xlu0 %494
        %v496 = vsel %vm275, %v485, %v487
        %v497 = vsel %vm275, %v487, %v489
        %v498 = vsel %vm275, %v491, %v493
        %v499 = vsel %vm275, %v493, %v495
        %v503 = vsel %vm282, %v477, 0
        %v505 = vsel %vm286, %v498, 0
        %v507 = vsel %vm286, %v499, 0
        %509 = vmatpush.msra.mxu0 0.0
        %510 = vmatpush.msra.mxu0 0.0
        %511 = vmatpush.msra.mxu0 0.0
        %512 = vmatpush.msra.mxu0 0.0
        %513 = vmatpush.msra.mxu0 0.0
        %514 = vmatpush.msra.mxu0 0.0
        %515 = vmatpush.msra.mxu0 0.0
        %516 = vmatpush.msra.mxu0 0.0
        %517 = vmatpush.msra.mxu0 0.0
        %518 = vmatpush.msra.mxu0 0.0
        %519 = vmatpush.msra.mxu0 0.0
        %520 = vmatpush.msra.mxu0 0.0
        %521 = vmatpush.msra.mxu0 0.0
        %522 = vmatpush.msra.mxu0 0.0
        %523 = vmatpush.msra.mxu0 %v505
        %524 = vmatpush.msra.mxu0 %v496
        %525 = vmatmul.f32.gmra.mxu0 %v503
        %v526 = vpop.f32.mrf.mxu0
        %v527 = vadd.f32 0.0, %v526
        %528 = vdwg.mxu0
        %529 = vmatpush.msra.mxu0 0.0
        %530 = vmatpush.msra.mxu0 0.0
        %531 = vmatpush.msra.mxu0 0.0
        %532 = vmatpush.msra.mxu0 0.0
        %533 = vmatpush.msra.mxu0 0.0
        %534 = vmatpush.msra.mxu0 0.0
        %535 = vmatpush.msra.mxu0 0.0
        %536 = vmatpush.msra.mxu0 0.0
        %537 = vmatpush.msra.mxu0 0.0
        %538 = vmatpush.msra.mxu0 0.0
        %539 = vmatpush.msra.mxu0 0.0
        %540 = vmatpush.msra.mxu0 0.0
        %541 = vmatpush.msra.mxu0 0.0
        %542 = vmatpush.msra.mxu0 0.0
        %543 = vmatpush.msra.mxu0 %v507
        %544 = vmatpush.msra.mxu0 %v497
        %545 = vmatmul.f32.gmra.mxu0 %v503
        %v546 = vpop.f32.mrf.mxu0
        %v547 = vadd.f32 0.0, %v546
        %548 = vdwg.mxu0
        %v550 = vsel %vm282, %v474, 0
        %v552 = vsel %vm286, %v472, 0
        %v554 = vsel %vm286, %v473, 0
        %556 = vmatpush.msra.mxu0 0.0
        %557 = vmatpush.msra.mxu0 0.0
        %558 = vmatpush.msra.mxu0 0.0
        %559 = vmatpush.msra.mxu0 0.0
        %560 = vmatpush.msra.mxu0 0.0
        %561 = vmatpush.msra.mxu0 0.0
        %562 = vmatpush.msra.mxu0 0.0
        %563 = vmatpush.msra.mxu0 0.0
        %564 = vmatpush.msra.mxu0 0.0
        %565 = vmatpush.msra.mxu0 0.0
        %566 = vmatpush.msra.mxu0 0.0
        %567 = vmatpush.msra.mxu0 0.0
        %568 = vmatpush.msra.mxu0 0.0
        %569 = vmatpush.msra.mxu0 0.0
        %570 = vmatpush.msra.mxu0 %v552
        %571 = vmatpush.msra.mxu0 %v470
        %572 = vmatmul.f32.gmra.mxu0 %v550
        %v573 = vpop.f32.mrf.mxu0
        %v574 = vadd.f32 %v527, %v573
        %575 = vdwg.mxu0
        %576 = vmatpush.msra.mxu0 0.0
        %577 = vmatpush.msra.mxu0 0.0
        %578 = vmatpush.msra.mxu0 0.0
        %579 = vmatpush.msra.mxu0 0.0
        %580 = vmatpush.msra.mxu0 0.0
        %581 = vmatpush.msra.mxu0 0.0
        %582 = vmatpush.msra.mxu0 0.0
        %583 = vmatpush.msra.mxu0 0.0
        %584 = vmatpush.msra.mxu0 0.0
        %585 = vmatpush.msra.mxu0 0.0
        %586 = vmatpush.msra.mxu0 0.0
        %587 = vmatpush.msra.mxu0 0.0
        %588 = vmatpush.msra.mxu0 0.0
        %589 = vmatpush.msra.mxu0 0.0
        %590 = vmatpush.msra.mxu0 %v554
        %591 = vmatpush.msra.mxu0 %v471
        %592 = vmatmul.f32.gmra.mxu0 %v550
        %v593 = vpop.f32.mrf.mxu0
        %v594 = vadd.f32 %v547, %v593
        %595 = vdwg.mxu0
        %v596 = vld [vmem:[%s378] sm:$0xff]
        %597 = vrot.lane.b32.xlu0 %v470, 96
        %v598 = vpop.permute.xlu0 %597
        %599 = vrot.lane.b32.xlu0 %v471, 96
        %v600 = vpop.permute.xlu0 %599
        %601 = vrot.lane.b32.xlu0 %v475, 96
        %v602 = vpop.permute.xlu0 %601
        %603 = vrot.lane.b32.xlu0 %v472, 96
        %v604 = vpop.permute.xlu0 %603
        %605 = vrot.lane.b32.xlu0 %v473, 96
        %v606 = vpop.permute.xlu0 %605
        %607 = vrot.lane.b32.xlu0 %v476, 96
        %v608 = vpop.permute.xlu0 %607
        %v609 = vsel %vm392, %v598, %v600
        %v610 = vsel %vm392, %v600, %v602
        %v611 = vsel %vm392, %v604, %v606
        %v612 = vsel %vm392, %v606, %v608
        %v616 = vsel %vm282, %v596, 0
        %v618 = vsel %vm286, %v611, 0
        %v620 = vsel %vm286, %v612, 0
        %622 = vmatpush.msra.mxu0 0.0
        %623 = vmatpush.msra.mxu0 0.0
        %624 = vmatpush.msra.mxu0 0.0
        %625 = vmatpush.msra.mxu0 0.0
        %626 = vmatpush.msra.mxu0 0.0
        %627 = vmatpush.msra.mxu0 0.0
        %628 = vmatpush.msra.mxu0 0.0
        %629 = vmatpush.msra.mxu0 0.0
        %630 = vmatpush.msra.mxu0 0.0
        %631 = vmatpush.msra.mxu0 0.0
        %632 = vmatpush.msra.mxu0 0.0
        %633 = vmatpush.msra.mxu0 0.0
        %634 = vmatpush.msra.mxu0 0.0
        %635 = vmatpush.msra.mxu0 0.0
        %636 = vmatpush.msra.mxu0 %v618
        %637 = vmatpush.msra.mxu0 %v609
        %638 = vmatmul.f32.gmra.mxu0 %v616
        %v639 = vpop.f32.mrf.mxu0
        %v640 = vadd.f32 0.0, %v639
        %641 = vdwg.mxu0
        %642 = vmatpush.msra.mxu0 0.0
        %643 = vmatpush.msra.mxu0 0.0
        %644 = vmatpush.msra.mxu0 0.0
        %645 = vmatpush.msra.mxu0 0.0
        %646 = vmatpush.msra.mxu0 0.0
        %647 = vmatpush.msra.mxu0 0.0
        %648 = vmatpush.msra.mxu0 0.0
        %649 = vmatpush.msra.mxu0 0.0
        %650 = vmatpush.msra.mxu0 0.0
        %651 = vmatpush.msra.mxu0 0.0
        %652 = vmatpush.msra.mxu0 0.0
        %653 = vmatpush.msra.mxu0 0.0
        %654 = vmatpush.msra.mxu0 0.0
        %655 = vmatpush.msra.mxu0 0.0
        %656 = vmatpush.msra.mxu0 %v620
        %657 = vmatpush.msra.mxu0 %v610
        %658 = vmatmul.f32.gmra.mxu0 %v616
        %v659 = vpop.f32.mrf.mxu0
        %v660 = vadd.f32 0.0, %v659
        %661 = vdwg.mxu0
        %v662 = vadd.f32 %v574, %v640
        %v663 = vadd.f32 %v594, %v660
        %s664 = sadd.s32 %s448, 1
        %s665 = smul.u32 %s664, 2
        %s666 = smul.addr %s665, 8
        %s667 = scalar_lea.vmem [#allocation2], %s666
        %668 = vst [vmem:[%s667] sm:$0xff] %v662
        %669 = vst [vmem:[%s667 + $0x8] sm:$0xff] %v663
        %v670 = vld [vmem:[#allocation3] sm:$0xff]
        %v671 = vadd.f32 %v662, %v663
        %672 = vadd.xlane.f32.xlu0 %v671
        %v673 = vpop.xlane.xlu0 %672
        %v674 = vadd.f32 %v670, %v673
        %675 = vst.msk [vmem:[#allocation3] sm:$0xff] %vm459, %v674
        %v676 = vld [vmem:[#allocation4] sm:$0xff]
        %v677 = vmul.f32 %v662, %v662
        %v678 = vmul.f32 %v663, %v663
        %v679 = vadd.f32 %v677, %v678
        %680 = vadd.xlane.f32.xlu0 %v679
        %v681 = vpop.xlane.xlu0 %680
        %v682 = vadd.f32 %v676, %v681
        %683 = vst.msk [vmem:[#allocation4] sm:$0xff] %vm459, %v682
      $region40: #{conv_bn_relu.1} parent=35 // pred_fallthru
        _
      %p684 = scmp.eq.s32.totalorder %s19, 1
      // Predicated region
      $region45: #{conv_bn_relu.1} parent=35 // pred_check
        %p685 = pneg %p684
      $region46: #{conv_bn_relu.1} parent=35 // pred_check_branch
        %687 = sbr.rel (%p685) target = $region48
      $region47: #{conv_bn_relu.1} parent=35 // pred_region
        %p688 = scmp.eq.s32.totalorder %s20, 0
        // Predicated region
        $region49: #{conv_bn_relu.1} parent=47 // pred_check
          %p689 = pneg %p688
        $region50: #{conv_bn_relu.1} parent=47 // pred_check_branch
          %691 = sbr.rel (%p689) target = $region52
        $region51: #{conv_bn_relu.1} parent=47 // pred_region
          %v692 = vld [vmem:[#allocation3] sm:$0xff]
          %v693 = vmul.f32 %v692, 0.001953125
          %v694 = vld [vmem:[#allocation4] sm:$0xff]
          %v695 = vmul.f32 %v694, 0.001953125
          %v696 = vmul.f32 %v693, %v693
          %v697 = vsub.f32 %v695, %v696
          %v698 = vmax.f32 %v697, 0.0
          %v699 = vld [vmem:[%s2] sm:$0xff]
          %v700 = vadd.f32 %v698, 1e-05
          %v701 = vrsqrt.pop %v700
          %v702 = vmul.f32 %v701, %v700
          %v703 = vmul.f32 %v702, %v701
          %v704 = vmul.f32 0.5, %v703
          %v705 = vsub.f32 1.5, %v704
          %v706 = vmul.f32 %v701, %v705
          %vm707 = vweird.f32 %v700
          %vm708 = vweird.f32 %v701
          %vm709 = vmor %vm707, %vm708
          %v710 = vsel %vm709, %v701, %v706
          %v711 = vmul.f32 %v699, %v710
          %vm712 = vcmask 7168
          %713 = vst.msk [vmem:[#allocation5] sm:$0xff] %vm712, %v711
          %v714 = vld [vmem:[%s3] sm:$0xff]
          %v715 = vmul.f32 %v693, %v711
          %v716 = vsub.f32 %v714, %v715
          %717 = vst.msk [vmem:[#allocation6] sm:$0xff] %vm712, %v716
        $region52: #{conv_bn_relu.1} parent=47 // pred_fallthru
          _
        %s718 = smul.u32 %s20, 2
        %s719 = smul.u32 %s718, 2
        %s720 = smul.addr %s719, 8
        %s721 = scalar_lea.vmem [#allocation2], %s720
        %v722 = vld [vmem:[%s721] sm:$0xff]
        %v723 = vld [vmem:[%s721 + $0x8] sm:$0xff]
        %v724 = vld [vmem:[#allocation5] sm:$0xff]
        %726 = vset.pattern.permute.xlu0 0
        %727 = vperm.xlu0 %726, %v724
        %v728 = vpop.permute.xlu0 %727
        %v730 = vmul.f32 %v722, %v728
        %v731 = vmul.f32 %v723, %v728
        %v732 = vld [vmem:[#allocation6] sm:$0xff]
        %734 = vset.pattern.permute.xlu0 0
        %735 = vperm.xlu0 %734, %v732
        %v736 = vpop.permute.xlu0 %735
        %v738 = vadd.f32 %v730, %v736
        %v739 = vadd.f32 %v731, %v736
        %v740 = vmax.f32 %v738, 0.0
        %v741 = vmax.f32 %v739, 0.0
        %742 = vst [vmem:[%s234] sm:$0xff] %v740
        %743 = vst [vmem:[%s234 + $0x8] sm:$0xff] %v741
        %s744 = sadd.s32 %s718, 1
        %s745 = smul.u32 %s744, 2
        %s746 = smul.addr %s745, 8
        %s747 = scalar_lea.vmem [#allocation2], %s746
        %v748 = vld [vmem:[%s747] sm:$0xff]
        %v749 = vld [vmem:[%s747 + $0x8] sm:$0xff]
        %v750 = vld [vmem:[#allocation5] sm:$0xff]
        %752 = vset.pattern.permute.xlu0 0
        %753 = vperm.xlu0 %752, %v750
        %v754 = vpop.permute.xlu0 %753
        %v756 = vmul.f32 %v748, %v754
        %v757 = vmul.f32 %v749, %v754
        %v758 = vld [vmem:[#allocation6] sm:$0xff]
        %760 = vset.pattern.permute.xlu0 0
        %761 = vperm.xlu0 %760, %v758
        %v762 = vpop.permute.xlu0 %761
        %v764 = vadd.f32 %v756, %v762
        %v765 = vadd.f32 %v757, %v762
        %v766 = vmax.f32 %v764, 0.0
        %v767 = vmax.f32 %v765, 0.0
        %s768 = scalar_lea.vmem %s234, 16
        %769 = vst [vmem:[%s768] sm:$0xff] %v766
        %770 = vst [vmem:[%s768 + $0x8] sm:$0xff] %v767
      $region48: #{conv_bn_relu.1} parent=35 // pred_fallthru
        _
      %s771 = smul.u32 %s20, %s19
      %s772 = smul.u32 2, %s771
      %p773 = scmp.lt.s32.totalorder %s772, 1
      %s774 = scalar_select %p773, %s772, 1
      %s775 = smul.addr %s774, 2
      %s776 = smul.addr %s775, 8
      %s777 = scalar_lea.vmem %s4, %s776
      // Predicated region
      $region53: #{conv_bn_relu.1} parent=35 // pred_check
        %p778 = pneg %p140
      $region54: #{conv_bn_relu.1} parent=35 // pred_check_branch
        %780 = sbr.rel (%p778) target = $region56
      $region55: #{conv_bn_relu.1} parent=35 // pred_region
        %s781 = smul.u32 %s20, %s19
        %s782 = smul.u32 2, %s781
      $region56: #{conv_bn_relu.1} parent=35 // pred_fallthru
        _
    $region36: #{conv_bn_relu.1} parent=5 // pred_fallthru
      _
    %p783 = scmp.le.s32.totalorder 2, %s10
    // Predicated region
    $region57: #{conv_bn_relu.1} parent=5 // pred_check
      %p784 = pneg %p783
    $region58: #{conv_bn_relu.1} parent=5 // pred_check_branch
      %786 = sbr.rel (%p784) target = $region60
    $region59: #{conv_bn_relu.1} parent=5 // pred_region
      %s787 = ssub.s32 %s10, 2
      // Predicated region
      $region61: #{conv_bn_relu.1} parent=59 // pred_check
        %p788 = pneg %p146
      $region62: #{conv_bn_relu.1} parent=59 // pred_check_branch
        %790 = sbr.rel (%p788) target = $region64
      $region63: #{conv_bn_relu.1} parent=59 // pred_region
        %s791 = smul.u32 %s22, %s21
        %s792 = smul.u32 2, %s791
        %p793 = scmp.lt.s32.totalorder %s792, 1
        %s794 = scalar_select %p793, %s792, 1
        %s795 = smul.addr %s794, 2
        %s796 = smul.addr %s795, 8
        %s797 = scalar_lea.vmem %s4, %s796
      $region64: #{conv_bn_relu.1} parent=59 // pred_fallthru
        _
    $region60: #{conv_bn_relu.1} parent=5 // pred_fallthru
      _
  $region6: #{conv_bn_relu.1} parent=0 // loop_footer
    %s14 = sadd.s32 1, %s10
  $region7: #{conv_bn_relu.1} parent=0 // loop_footer_branch
    %9 = sbr.rel target = $region3
  $region8: #{conv_bn_relu.1} parent=0 // loop_exit
    _

</llo_original>
